<compile_context>
chip_gen: v6e
topology: v6e:2x2x1
jax: 0.10.0
libtpu: 0.0.40
codegen_flags: <defaults>
</compile_context>

<pallas_src>
import jax
import jax.numpy as jnp
from jax.experimental import pallas as pl
from jax.experimental.pallas import tpu as pltpu


def _round_up(n, m):
    return ((n + m - 1) // m) * m


def decoder_kernel(x_ref, w1_ref, b1_ref, w2_ref, b2_ref, out_ref, h_ref):
    """One (batch-tile i, output-tile j) grid step.

    x_ref  : (TM, L)   bf16  batch tile of latents
    w1_ref : (L,  Hp)  bf16  resident, pre-transposed (in, out)
    b1_ref : (1,  Hp)  f32   resident
    w2_ref : (Hp, TN)  bf16  output-dim tile j, pre-transposed
    b2_ref : (1,  TN)  f32
    out_ref: (TM, TN)  f32
    h_ref  : (TM, Hp)  bf16  VMEM scratch: hidden activations of batch tile i
    """
    # The hidden layer depends only on the batch tile i: compute it once
    # (j == 0) and cache it in VMEM scratch for every output-dim tile j.
    @pl.when(pl.program_id(1) == 0)
    def _():
        h = jnp.dot(x_ref[...], w1_ref[...],
                    preferred_element_type=jnp.float32)
        h = jnp.maximum(h + b1_ref[...], 0.0)        # f32 bias add + ReLU
        # bf16 cache: halves the live intermediate, feeds the 2nd MXU pass
        # natively.  Padded hidden lanes are exactly 0 (relu(0 + 0)).
        h_ref[...] = h.astype(h_ref.dtype)

    y = jnp.dot(h_ref[...], w2_ref[...], preferred_element_type=jnp.float32)
    y = jnp.maximum(y + b2_ref[...], 0.0)
    out_ref[...] = y.astype(out_ref.dtype)


@jax.jit
def decoder_forward(x, w1, b1, w2, b2):
    """Pallas Decoder forward.

    x  : (B, latent)         float32
    w1 : (hidden, latent)    PyTorch Linear convention (out, in)
    b1 : (hidden,)
    w2 : (output, hidden)
    b2 : (output,)
    returns (B, output) float32
    """
    B, latent = x.shape
    hidden = w1.shape[0]
    output = w2.shape[0]

    LANE = 128
    Hp = _round_up(hidden, LANE)      # padded hidden dim (lane-dense)
    Op = _round_up(output, LANE)      # padded output dim (lane-dense stores)

    # Batch tiling: single full-dim block for small B (always legal); 256-row
    # tiles for large B (amortizes per-step overhead, lets the two v7x
    # TensorCores split the "parallel" axis).  Trailing partial block is
    # masked by Pallas — no batch padding.
    TM = B if B <= 256 else 256
    n_m = pl.cdiv(B, TM)

    # Output-dim tiling: bound the W2 tile so the working set also fits v7x
    # (64 MiB/TC; resident weights are duplicated across both cores on the
    # megacore-parallel batch axis).  Degenerates to a single tile here.
    W2_TILE_BUDGET = 8 * 1024 * 1024                       # bytes of bf16 W2
    tn_cap = max(LANE, ((W2_TILE_BUDGET // (Hp * 2)) // LANE) * LANE)
    TN = min(Op, tn_cap)
    n_n = pl.cdiv(Op, TN)

    # One-time layout prep (tiny, fused under jit): transpose PyTorch (out,in)
    # weights to canonical (in,out), cast matmul operands to bf16 (f32
    # accumulation in-kernel), zero-pad feature dims to lane multiples so
    # stores are unmasked and padded lanes stay inert (relu(0 + 0) == 0).
    xb = x.astype(jnp.bfloat16)
    w1t = jnp.pad(w1.T, ((0, 0), (0, Hp - hidden))).astype(jnp.bfloat16)
    b1p = jnp.pad(b1, (0, Hp - hidden)).reshape(1, Hp)
    w2t = jnp.pad(w2.T, ((0, Hp - hidden), (0, Op - output))).astype(jnp.bfloat16)
    b2p = jnp.pad(b2, (0, Op - output)).reshape(1, Op)

    # Resident operands (constant index_map) need only one VMEM buffer.
    resident = pl.Buffered(1)
    w2_mode = pl.Buffered(1) if n_n == 1 else None   # default double-buffer if tiled

    # Scoped-VMEM budget: actual working set with headroom, clamped so it is
    # valid on every generation (v5e default 16 MiB, v7x physical 64 MiB/TC).
    vmem_needed = (
        2 * TM * latent * 2                            # x tile (2 bufs, bf16)
        + latent * Hp * 2                              # W1 (1 buf, bf16)
        + Hp * 4                                       # b1 (f32)
        + (1 if n_n == 1 else 2) * Hp * TN * 2         # W2 tile(s) (bf16)
        + (1 if n_n == 1 else 2) * TN * 4              # b2 tile(s)
        + 2 * TM * TN * 4                              # out tile (2 bufs, f32)
        + TM * Hp * 2                                  # hidden scratch (bf16)
    )
    vmem_limit = min(64 * 1024 * 1024, max(2 * vmem_needed, 32 * 1024 * 1024))

    out_padded = pl.pallas_call(
        decoder_kernel,
        out_shape=jax.ShapeDtypeStruct((B, Op), jnp.float32),
        grid=(n_m, n_n),
        in_specs=[
            pl.BlockSpec((TM, latent), lambda i, j: (i, 0)),               # x tile
            pl.BlockSpec((latent, Hp), lambda i, j: (0, 0),
                         pipeline_mode=resident),                          # W1 resident
            pl.BlockSpec((1, Hp), lambda i, j: (0, 0),
                         pipeline_mode=resident),                          # b1 resident
            pl.BlockSpec((Hp, TN), lambda i, j: (0, j),
                         pipeline_mode=w2_mode),                           # W2 tile
            pl.BlockSpec((1, TN), lambda i, j: (0, j),
                         pipeline_mode=w2_mode),                           # b2 tile
        ],
        out_specs=pl.BlockSpec((TM, TN), lambda i, j: (i, j)),
        scratch_shapes=[pltpu.VMEM((TM, Hp), jnp.bfloat16)],
        compiler_params=pltpu.CompilerParams(
            dimension_semantics=("parallel", "arbitrary"),
            vmem_limit_bytes=vmem_limit,
        ),
    )(xb, w1t, b1p, w2t, b2p)

    return out_padded if Op == output else out_padded[:, :output]


def decoder_reference(x, w1, b1, w2, b2):
    """Pure-JAX reference mirroring the PyTorch forward (f32)."""
    h = jnp.maximum(x @ w1.T + b1, 0.0)
    return jnp.maximum(h @ w2.T + b2, 0.0)


if __name__ == "__main__":
    # Small shapes consistent with the module: Decoder(latent=8, hidden=32, out=64)
    B, latent_size, hidden_size, output_size = 8, 8, 32, 64

    key = jax.random.PRNGKey(0)
    kx, kw1, kb1, kw2, kb2 = jax.random.split(key, 5)

    x = jax.random.normal(kx, (B, latent_size), dtype=jnp.float32)
    # Deterministic parameter init (PyTorch Linear weight shape: (out, in)).
    w1 = jax.random.normal(kw1, (hidden_size, latent_size), dtype=jnp.float32) * 0.1
    b1 = jax.random.normal(kb1, (hidden_size,), dtype=jnp.float32) * 0.1
    w2 = jax.random.normal(kw2, (output_size, hidden_size), dtype=jnp.float32) * 0.1
    b2 = jax.random.normal(kb2, (output_size,), dtype=jnp.float32) * 0.1

    out = decoder_forward(x, w1, b1, w2, b2)
    out = jax.block_until_ready(out)

    ref = decoder_reference(x, w1, b1, w2, b2)
    assert out.shape == (B, output_size)
    # bf16 MXU inputs with f32 accumulation: tolerance loosened accordingly.
    assert jnp.allclose(out, ref, atol=2e-2, rtol=2e-2), "mismatch vs reference"

    print("KERNEL_OK")
</pallas_src>

<mosaic_0001>
module attributes {stable_mosaic.version = 11 : i64} {
  func.func @decoder_kernel(%arg0: i32, %arg1: i32, %arg2: memref<8x8xbf16, #tpu.memory_space<vmem>>, %arg3: memref<8x128xbf16, #tpu.memory_space<vmem>>, %arg4: memref<1x128xf32, #tpu.memory_space<vmem>>, %arg5: memref<128x128xbf16, #tpu.memory_space<vmem>>, %arg6: memref<1x128xf32, #tpu.memory_space<vmem>>, %arg7: memref<8x128xf32, #tpu.memory_space<vmem>>, %arg8: memref<8x128xbf16, #tpu.memory_space<vmem>>) attributes {dimension_semantics = [#tpu.dimension_semantics<parallel>, #tpu.dimension_semantics<arbitrary>], iteration_bounds = array<i64: 1, 1>, scalar_prefetch = 0 : i64, scratch_operands = 1 : i64, tpu.core_type = #tpu.core_type<tc>, window_params = [{transform_indices = @transform_0, window_bounds = array<i64: 8, 8>}, {pipeline_mode = #tpu.pipeline_mode<synchronous>, transform_indices = @transform_1, window_bounds = array<i64: 8, 128>}, {pipeline_mode = #tpu.pipeline_mode<synchronous>, transform_indices = @transform_2, window_bounds = array<i64: 1, 128>}, {pipeline_mode = #tpu.pipeline_mode<synchronous>, transform_indices = @transform_3, window_bounds = array<i64: 128, 128>}, {pipeline_mode = #tpu.pipeline_mode<synchronous>, transform_indices = @transform_4, window_bounds = array<i64: 1, 128>}, {transform_indices = @transform_5, window_bounds = array<i64: 8, 128>}]} {
    %c0_i32 = arith.constant 0 : i32
    %0 = arith.cmpi eq, %arg1, %c0_i32 : i32
    %1 = arith.extui %0 : i1 to i32
    %c0_i32_0 = arith.constant 0 : i32
    %2 = arith.cmpi ne, %1, %c0_i32_0 : i32
    scf.if %2 {
      %c0_9 = arith.constant 0 : index
      %c0_10 = arith.constant 0 : index
      %12 = vector.load %arg2[%c0_9, %c0_10] : memref<8x8xbf16, #tpu.memory_space<vmem>>, vector<8x8xbf16>
      %c0_11 = arith.constant 0 : index
      %c0_12 = arith.constant 0 : index
      %13 = vector.load %arg3[%c0_11, %c0_12] : memref<8x128xbf16, #tpu.memory_space<vmem>>, vector<8x128xbf16>
      %cst_13 = arith.constant dense<0.000000e+00> : vector<8x128xf32>
      %14 = tpu.matmul %12, %13, %cst_13 {dimension_numbers = #tpu.dot_dimension_numbers<[1], [0], [0], [1], [0, 0, 1, 1], [], []>} : vector<8x8xbf16>, vector<8x128xbf16>, vector<8x128xf32> -> vector<8x128xf32>
      %c0_14 = arith.constant 0 : index
      %c0_15 = arith.constant 0 : index
      %15 = vector.load %arg4[%c0_14, %c0_15] : memref<1x128xf32, #tpu.memory_space<vmem>>, vector<1x128xf32>
      %16 = vector.broadcast %15 : vector<1x128xf32> to vector<8x128xf32>
      %17 = arith.addf %14, %16 : vector<8x128xf32>
      %cst_16 = arith.constant 0.000000e+00 : f32
      %18 = vector.broadcast %cst_16 : f32 to vector<8x128xf32>
      %19 = arith.maximumf %17, %18 : vector<8x128xf32>
      %20 = arith.truncf %19 : vector<8x128xf32> to vector<8x128xbf16>
      %c0_17 = arith.constant 0 : index
      %c0_18 = arith.constant 0 : index
      %21 = vector.load %arg8[%c0_17, %c0_18] : memref<8x128xbf16, #tpu.memory_space<vmem>>, vector<8x128xbf16>
      tpu.vector_store %arg8[%c0_17, %c0_18], %20 {strides = array<i32>} : memref<8x128xbf16, #tpu.memory_space<vmem>>, vector<8x128xbf16>,
    } else {
    }
    %c0 = arith.constant 0 : index
    %c0_1 = arith.constant 0 : index
    %3 = vector.load %arg8[%c0, %c0_1] : memref<8x128xbf16, #tpu.memory_space<vmem>>, vector<8x128xbf16>
    %c0_2 = arith.constant 0 : index
    %c0_3 = arith.constant 0 : index
    %4 = vector.load %arg5[%c0_2, %c0_3] : memref<128x128xbf16, #tpu.memory_space<vmem>>, vector<128x128xbf16>
    %cst = arith.constant dense<0.000000e+00> : vector<8x128xf32>
    %5 = tpu.matmul %3, %4, %cst {dimension_numbers = #tpu.dot_dimension_numbers<[1], [0], [0], [1], [0, 0, 1, 1], [], []>} : vector<8x128xbf16>, vector<128x128xbf16>, vector<8x128xf32> -> vector<8x128xf32>
    %c0_4 = arith.constant 0 : index
    %c0_5 = arith.constant 0 : index
    %6 = vector.load %arg6[%c0_4, %c0_5] : memref<1x128xf32, #tpu.memory_space<vmem>>, vector<1x128xf32>
    %7 = vector.broadcast %6 : vector<1x128xf32> to vector<8x128xf32>
    %8 = arith.addf %5, %7 : vector<8x128xf32>
    %cst_6 = arith.constant 0.000000e+00 : f32
    %9 = vector.broadcast %cst_6 : f32 to vector<8x128xf32>
    %10 = arith.maximumf %8, %9 : vector<8x128xf32>
    %c0_7 = arith.constant 0 : index
    %c0_8 = arith.constant 0 : index
    %11 = vector.load %arg7[%c0_7, %c0_8] : memref<8x128xf32, #tpu.memory_space<vmem>>, vector<8x128xf32>
    tpu.vector_store %arg7[%c0_7, %c0_8], %10 {strides = array<i32>} : memref<8x128xf32, #tpu.memory_space<vmem>>, vector<8x128xf32>,
    return
  }
  func.func @transform_0(%arg0: i32, %arg1: i32) -> (i32, i32) {
    %c0_i32 = arith.constant 0 : i32
    %c0_i32_0 = arith.constant 0 : i32
    return %arg0, %c0_i32 : i32, i32
  }
  func.func @transform_1(%arg0: i32, %arg1: i32) -> (i32, i32) {
    %c0_i32 = arith.constant 0 : i32
    %c0_i32_0 = arith.constant 0 : i32
    %c0_i32_1 = arith.constant 0 : i32
    return %c0_i32, %c0_i32_0 : i32, i32
  }
  func.func @transform_2(%arg0: i32, %arg1: i32) -> (i32, i32) {
    %c0_i32 = arith.constant 0 : i32
    %c0_i32_0 = arith.constant 0 : i32
    %c0_i32_1 = arith.constant 0 : i32
    return %c0_i32, %c0_i32_0 : i32, i32
  }
  func.func @transform_3(%arg0: i32, %arg1: i32) -> (i32, i32) {
    %c0_i32 = arith.constant 0 : i32
    %c0_i32_0 = arith.constant 0 : i32
    return %c0_i32, %arg1 : i32, i32
  }
  func.func @transform_4(%arg0: i32, %arg1: i32) -> (i32, i32) {
    %c0_i32 = arith.constant 0 : i32
    %c0_i32_0 = arith.constant 0 : i32
    return %c0_i32, %arg1 : i32, i32
  }
  func.func @transform_5(%arg0: i32, %arg1: i32) -> (i32, i32) {
    %c0_i32 = arith.constant 0 : i32
    return %arg0, %arg1 : i32, i32
  }
}

</mosaic_0001>

<llo_original>
// kernel: decoder_forward.1
$region0: #{decoder_forward.1}
  #allocation0 [shape = 'u32[]', space=smem, size = 0x4, offset = 0x4, fixed_abs, tag = 'smem constant byte address 0x4 - core index']
  #allocation1 [shape = 'u32[144,128]{1,0:T(1,128)}', space=vmem, size = 0x12000, scoped, tag = 'internal scratch']
  #allocation2 [shape = 'bf16[8,128]{1,0:T(8,128)(2,1)}', space=vmem, size = 0x800, scoped, tag = 'scratch operand']
  %s0 = inlined_call_operand.vmem [shape: bf16[8,8], index: 0, kind: input, shape index: {}]
  %s1 = inlined_call_operand.vmem [shape: bf16[8,128], index: 1, kind: input, shape index: {}]
  %s2 = inlined_call_operand.vmem [shape: f32[1,128], index: 2, kind: input, shape index: {}]
  %s3 = inlined_call_operand.vmem [shape: bf16[128,128], index: 3, kind: input, shape index: {}]
  %s4 = inlined_call_operand.vmem [shape: f32[1,128], index: 4, kind: input, shape index: {}]
  %s5 = inlined_call_operand.hbm [shape: f32[8,128], index: 5, kind: output, shape index: {}]
  %s6 = sld [smem:[#allocation0]]
  $region34: #{decoder_forward.1} parent=0
    _
  %s8 = ssub.s32 1, %s6
  %s9 = scalar_select 0, %s8, %s6
  $region1: #{decoder_forward.1} parent=0
    #allocation3 [shape = 'u8[4096]{0}', space=vmem, size = 0x1000, scoped, tag = 'output window, operand 0, single buffered']
    #allocation4 [shape = 's32[1]{0}', space=sflag, size = 0x4, scoped, tag = 'scoped memory for decoder_forward.1']
    %10 = vsyncpa [#allocation4], 0
    // Predicated region
    $region2: #{decoder_forward.1} parent=1 // pred_check
      _
    $region3: #{decoder_forward.1} parent=1 // pred_check_branch
      %12 = sbr.rel (0) target = $region5
    $region4: #{decoder_forward.1} parent=1 // pred_region
      _
    $region5: #{decoder_forward.1} parent=1 // pred_fallthru
      _
    // Predicated region
    $region6: #{decoder_forward.1} parent=1 // pred_check
      _
    $region7: #{decoder_forward.1} parent=1 // pred_check_branch
      %14 = sbr.rel (0) target = $region9
    $region8: #{decoder_forward.1} parent=1 // pred_region
      _
    $region9: #{decoder_forward.1} parent=1 // pred_fallthru
      _
    // Predicated region
    $region10: #{decoder_forward.1} parent=1 // pred_check
      _
    $region11: #{decoder_forward.1} parent=1 // pred_check_branch
      %16 = sbr.rel (0) target = $region13
    $region12: #{decoder_forward.1} parent=1 // pred_region
      _
    $region13: #{decoder_forward.1} parent=1 // pred_fallthru
      _
    // Predicated region
    $region14: #{decoder_forward.1} parent=1 // pred_check
      _
    $region15: #{decoder_forward.1} parent=1 // pred_check_branch
      %18 = sbr.rel (0) target = $region17
    $region16: #{decoder_forward.1} parent=1 // pred_region
      _
    $region17: #{decoder_forward.1} parent=1 // pred_fallthru
      _
    // Predicated region
    $region18: #{decoder_forward.1} parent=1 // pred_check
      _
    $region19: #{decoder_forward.1} parent=1 // pred_check_branch
      %20 = sbr.rel (0) target = $region21
    $region20: #{decoder_forward.1} parent=1 // pred_region
      _
    $region21: #{decoder_forward.1} parent=1 // pred_fallthru
      _
    %p22 = scmp.eq.s32.totalorder 0, 0
    // Predicated region
    $region22: #{decoder_forward.1} parent=1 // pred_check
      %p23 = pneg %p22
    $region23: #{decoder_forward.1} parent=1 // pred_check_branch
      %25 = sbr.rel (%p23) target = $region25
    $region24: #{decoder_forward.1} parent=1 // pred_region
      %v26 = vld [vmem:[%s0] sm:$0xf]
      %v27 = vld [vmem:[%s1] sm:$0xf]
      %v28 = vld [vmem:[%s2] sm:$0x1]
      %v30 = vlaneseq
      %v31 = vshrl.u32 %v30, 7
      %v32 = vsub.s32 0, %v31
      %v33 = vrot.slane %v28, %v32
      %vm35 = vcmask 64512
      %v37 = vsel %vm35, %v26, 0
      %vm39 = vcmask 1043456
      %v41 = vsel %vm39, %v27, 0
      %43 = vmatprep.subr.bf16.mxu0 0
      %44 = vmatpush1.bf16.msra.mxu0 0
      %45 = vmatprep.subr.bf16.mxu0 0
      %46 = vmatpush1.bf16.msra.mxu0 0
      %47 = vmatprep.subr.bf16.mxu0 0
      %48 = vmatpush1.bf16.msra.mxu0 0
      %49 = vmatprep.subr.bf16.mxu0 0
      %50 = vmatpush1.bf16.msra.mxu0 0
      %51 = vmatprep.subr.bf16.mxu0 0
      %52 = vmatpush1.bf16.msra.mxu0 0
      %53 = vmatprep.subr.bf16.mxu0 0
      %54 = vmatpush1.bf16.msra.mxu0 0
      %55 = vmatprep.subr.bf16.mxu0 0
      %56 = vmatpush1.bf16.msra.mxu0 0
      %57 = vmatprep.subr.bf16.mxu0 0
      %58 = vmatpush1.bf16.msra.mxu0 %v41
      %59 = vmatprep.subr.bf16.mxu0 0
      %60 = vmatpush2.bf16.msra.mxu0 0
      %61 = vmatprep.subr.bf16.mxu0 0
      %62 = vmatpush2.bf16.msra.mxu0 0
      %63 = vmatprep.subr.bf16.mxu0 0
      %64 = vmatpush2.bf16.msra.mxu0 0
      %65 = vmatprep.subr.bf16.mxu0 0
      %66 = vmatpush2.bf16.msra.mxu0 0
      %67 = vmatprep.subr.bf16.mxu0 0
      %68 = vmatpush2.bf16.msra.mxu0 0
      %69 = vmatprep.subr.bf16.mxu0 0
      %70 = vmatpush2.bf16.msra.mxu0 0
      %71 = vmatprep.subr.bf16.mxu0 0
      %72 = vmatpush2.bf16.msra.mxu0 0
      %73 = vmatprep.subr.bf16.mxu0 0
      %74 = vmatpush2.bf16.msra.mxu0 0
      %75 = vmatprep.mubr.bf16.mxu0 0
      %76 = vmatmul.mubr.bf16.gmra.mxu0 %v37
      %v77 = vpop.f32.mrf.mxu0
      %v78 = vadd.f32 %v33, %v77
      %v79 = vpop.f32.mrf.mxu0
      %v80 = vpop.f32.mrf.mxu0
      %v81 = vpop.f32.mrf.mxu0
      %82 = vdwg.mxu0
      %v83 = vmax.f32 %v78, 0.0
      %v84 = vpack.c.bf16 %v83, %v83
      %85 = vst [vmem:[#allocation2] sm:$0xf] %v84
    $region25: #{decoder_forward.1} parent=1 // pred_fallthru
      _
    %v86 = vld [vmem:[#allocation2] sm:$0xf]
    %v87 = vld [vmem:[%s3] sm:$0xf]
    %v88 = vld [vmem:[%s3 + $0x4] sm:$0xf]
    %v89 = vld [vmem:[%s3 + $0x8] sm:$0xf]
    %v90 = vld [vmem:[%s3 + $0xc] sm:$0xf]
    %v91 = vld [vmem:[%s3 + $0x10] sm:$0xf]
    %v92 = vld [vmem:[%s3 + $0x14] sm:$0xf]
    %v93 = vld [vmem:[%s3 + $0x18] sm:$0xf]
    %v94 = vld [vmem:[%s3 + $0x1c] sm:$0xf]
    %v95 = vld [vmem:[%s3 + $0x20] sm:$0xf]
    %v96 = vld [vmem:[%s3 + $0x24] sm:$0xf]
    %v97 = vld [vmem:[%s3 + $0x28] sm:$0xf]
    %v98 = vld [vmem:[%s3 + $0x2c] sm:$0xf]
    %v99 = vld [vmem:[%s3 + $0x30] sm:$0xf]
    %v100 = vld [vmem:[%s3 + $0x34] sm:$0xf]
    %v101 = vld [vmem:[%s3 + $0x38] sm:$0xf]
    %v102 = vld [vmem:[%s3 + $0x3c] sm:$0xf]
    %v103 = vld [vmem:[%s4] sm:$0x1]
    %v105 = vlaneseq
    %v106 = vshrl.u32 %v105, 7
    %v107 = vsub.s32 0, %v106
    %v108 = vrot.slane %v103, %v107
    %v126 = vunpack.c.l.b16 %v87
    %v127 = vunpack.c.l.b16 %v88
    %v128 = vunpack.c.l.b16 %v89
    %v129 = vunpack.c.l.b16 %v90
    %v130 = vunpack.c.l.b16 %v91
    %v131 = vunpack.c.l.b16 %v92
    %v132 = vunpack.c.l.b16 %v93
    %v133 = vunpack.c.l.b16 %v94
    %v134 = vunpack.c.l.b16 %v95
    %v135 = vunpack.c.l.b16 %v96
    %v136 = vunpack.c.l.b16 %v97
    %v137 = vunpack.c.l.b16 %v98
    %v138 = vunpack.c.l.b16 %v99
    %v139 = vunpack.c.l.b16 %v100
    %v140 = vunpack.c.l.b16 %v101
    %v141 = vunpack.c.l.b16 %v102
    %v142 = vpack.c.b16 %v127, %v126
    %v143 = vpack.c.b16 %v129, %v128
    %v144 = vpack.c.b16 %v131, %v130
    %v145 = vpack.c.b16 %v133, %v132
    %v146 = vpack.c.b16 %v135, %v134
    %v147 = vpack.c.b16 %v137, %v136
    %v148 = vpack.c.b16 %v139, %v138
    %v149 = vpack.c.b16 %v141, %v140
    %158 = vmatprep.subr.bf16.mxu0 0
    %159 = vmatpush1.bf16.msra.mxu0 %v149
    %160 = vmatprep.subr.bf16.mxu0 0
    %161 = vmatpush1.bf16.msra.mxu0 %v148
    %162 = vmatprep.subr.bf16.mxu0 0
    %163 = vmatpush1.bf16.msra.mxu0 %v147
    %164 = vmatprep.subr.bf16.mxu0 0
    %165 = vmatpush1.bf16.msra.mxu0 %v146
    %166 = vmatprep.subr.bf16.mxu0 0
    %167 = vmatpush1.bf16.msra.mxu0 %v145
    %168 = vmatprep.subr.bf16.mxu0 0
    %169 = vmatpush1.bf16.msra.mxu0 %v144
    %170 = vmatprep.subr.bf16.mxu0 0
    %171 = vmatpush1.bf16.msra.mxu0 %v143
    %172 = vmatprep.subr.bf16.mxu0 0
    %173 = vmatpush1.bf16.msra.mxu0 %v142
    %174 = vmatprep.subr.bf16.mxu0 0
    %175 = vmatpush2.bf16.msra.mxu0 0
    %176 = vmatprep.subr.bf16.mxu0 0
    %177 = vmatpush2.bf16.msra.mxu0 0
    %178 = vmatprep.subr.bf16.mxu0 0
    %179 = vmatpush2.bf16.msra.mxu0 0
    %180 = vmatprep.subr.bf16.mxu0 0
    %181 = vmatpush2.bf16.msra.mxu0 0
    %182 = vmatprep.subr.bf16.mxu0 0
    %183 = vmatpush2.bf16.msra.mxu0 0
    %184 = vmatprep.subr.bf16.mxu0 0
    %185 = vmatpush2.bf16.msra.mxu0 0
    %186 = vmatprep.subr.bf16.mxu0 0
    %187 = vmatpush2.bf16.msra.mxu0 0
    %188 = vmatprep.subr.bf16.mxu0 0
    %189 = vmatpush2.bf16.msra.mxu0 0
    %190 = vmatprep.mubr.bf16.mxu0 0
    %191 = vmatmul.mubr.bf16.gmra.mxu0 %v86
    %v192 = vpop.f32.mrf.mxu0
    %v193 = vadd.f32 %v108, %v192
    %v194 = vpop.f32.mrf.mxu0
    %v195 = vpop.f32.mrf.mxu0
    %v196 = vpop.f32.mrf.mxu0
    %197 = vdwg.mxu0
    %v198 = vmax.f32 %v193, 0.0
    %199 = vst [vmem:[#allocation3] sm:$0xff] %v198
    // Predicated region
    $region26: #{decoder_forward.1} parent=1 // pred_check
      _
    $region27: #{decoder_forward.1} parent=1 // pred_check_branch
      %201 = sbr.rel (0) target = $region29
    $region28: #{decoder_forward.1} parent=1 // pred_region
      %s203 = ssub.s32 128, 128
      %204 = vsyncadd [#allocation4], %s203
      %s206 = sshll.u32 [#allocation3], 4
      %s207 = int_to_ptr.vmem [resolvable:$true] %s206
      %209 = dma.vmem_to_hbm [thread:$0]  %s207, 128, %s5, [#allocation4]
    $region29: #{decoder_forward.1} parent=1 // pred_fallthru
      _
    // Predicated region
    $region30: #{decoder_forward.1} parent=1 // pred_check
      _
    $region31: #{decoder_forward.1} parent=1 // pred_check_branch
      %211 = sbr.rel (0) target = $region33
    $region32: #{decoder_forward.1} parent=1 // pred_region
      %212 = dma.done [#allocation4], 128
    $region33: #{decoder_forward.1} parent=1 // pred_fallthru
      _
    %213 = vsyncpa [#allocation4], 1

</llo_original>
